<compile_context>
chip_gen: v6e
topology: v6e:2x2x1
jax: 0.10.0
libtpu: 0.0.40
codegen_flags: <defaults>
</compile_context>

<pallas_src>
import functools

import jax
import jax.numpy as jnp
from jax.experimental import pallas as pl
from jax.experimental.pallas import tpu as pltpu


def _t_kernel(x_ref, a_ref, c_ref, o_ref, *, bn):
    # x_ref/o_ref: [bn, C, tm]   (voxels lane-dense, channels on sublanes)
    # a_ref:       [C, C]        collapsed weight (resident in VMEM)
    # c_ref:       [C, 1]        collapsed bias, broadcasts over lanes
    a = a_ref[...]
    c = c_ref[...]
    for b in range(bn):  # bn is a small static constant -> unrolled
        xb = x_ref[b]                                                  # [C, tm]
        yb = jnp.dot(a, xb, preferred_element_type=jnp.float32)        # MXU
        o_ref[b] = (xb + yb + c).astype(o_ref.dtype)


def _vmem_ceiling_bytes():
    """~75% of physical VMEM: ~48 MiB on v7x (64 MiB/TC), ~96 MiB on v5e/v6e."""
    try:
        cap = getattr(pltpu.get_tpu_info(), "vmem_capacity_bytes", None)
        if cap:
            return (int(cap) * 3) // 4
    except Exception:
        pass
    return 48 * 1024 * 1024  # safe on every generation


def t_forward(x_ncdhw, params, *, tile_m=2048):
    """Forward pass of the BPGAN `T` module. x_ncdhw: [N, C, D, H, W] float32."""
    w_dr, b_dr, w_c, b_c, w_di, b_di = params
    N, C, D, H, W = x_ncdhw.shape
    Ch = w_dr.shape[0]
    assert w_dr.shape == (Ch, C) and w_c.shape == (Ch, Ch) and w_di.shape == (C, Ch)
    M = D * H * W

    # NCDHW -> [N, C, M]: pure reshape of the channels-first layout (free).
    x3d = x_ncdhw.reshape(N, C, M)

    # Host-side algebraic collapse of the purely-linear chain (exact).
    hp = jax.lax.Precision.HIGHEST
    eye = jnp.eye(Ch, dtype=jnp.float32)
    p = eye + w_c + jnp.dot(w_c, w_c, precision=hp)                      # [Ch,Ch]
    a_mat = jnp.dot(w_di, jnp.dot(p, w_dr, precision=hp), precision=hp)  # [C, C]
    c_vec = (jnp.dot(
        w_di,
        jnp.dot(p, b_dr, precision=hp) + 2.0 * b_c + jnp.dot(w_c, b_c, precision=hp),
        precision=hp,
    ) + b_di).reshape(C, 1)                                              # [C, 1]

    # ---- tiling: lane-dense voxel tiles; fold batch rows when M is small ----
    tile_m = max(128, (tile_m // 128) * 128)
    if M > tile_m:
        bn, tm = 1, tile_m
    else:
        tm = M                                      # full spatial extent / block
        bn = max(1, min(N, tile_m // max(M, 1)))    # amortize per-step overhead
        while N % bn:                               # avoid ragged batch blocks
            bn -= 1
    num_n = pl.cdiv(N, bn)
    num_m = pl.cdiv(M, tm)     # partial last block OK: op is elementwise along M

    # keep >= 2 grid steps so both v7x TensorCores get work
    if num_n * num_m < 2:
        if bn > 1:
            bn = max(1, bn // 2)
            while N % bn:
                bn -= 1
            num_n = pl.cdiv(N, bn)
        elif tm >= 256:
            tm = max(128, ((tm // 2 + 127) // 128) * 128)
            num_m = pl.cdiv(M, tm)
    grid = (num_n, num_m)

    itemsize = jnp.dtype(x_ncdhw.dtype).itemsize
    cost = pl.CostEstimate(
        flops=2 * N * M * C * C,
        transcendentals=0,
        bytes_accessed=2 * N * C * M * itemsize + (C * C + C) * 4,
    )

    # VMEM: double-buffered x/out tiles + resident collapsed weights + headroom.
    tile_bytes = bn * C * tm * 4
    need = 4 * tile_bytes + 2 * (C * C + C) * 4 + (4 << 20)
    vmem_limit = int(min(_vmem_ceiling_bytes(), max(32 << 20, need)))

    out3d = pl.pallas_call(
        functools.partial(_t_kernel, bn=bn),
        out_shape=jax.ShapeDtypeStruct((N, C, M), x_ncdhw.dtype),
        grid_spec=pltpu.PrefetchScalarGridSpec(
            num_scalar_prefetch=0,
            grid=grid,
            in_specs=[
                pl.BlockSpec((bn, C, tm), lambda n, i: (n, 0, i)),  # x tile
                pl.BlockSpec((C, C), lambda n, i: (0, 0)),          # A (resident)
                pl.BlockSpec((C, 1), lambda n, i: (0, 0)),          # c (resident)
            ],
            out_specs=pl.BlockSpec((bn, C, tm), lambda n, i: (n, 0, i)),
        ),
        compiler_params=pltpu.CompilerParams(
            dimension_semantics=("parallel", "parallel"),
            vmem_limit_bytes=vmem_limit,
        ),
        cost_estimate=cost,
    )(x3d, a_mat, c_vec)

    return out3d.reshape(N, C, D, H, W)


def init_params(key, in_channels):
    """PyTorch-default-style init. Conv3d(kernel_size=1) weight [out,in,1,1,1]
    is stored here as [out, in]; uniform(-1/sqrt(fan_in), 1/sqrt(fan_in))."""
    C = in_channels
    Ch = C // 2
    ks = jax.random.split(key, 6)

    def uinit(k, shape, fan_in):
        bound = 1.0 / (fan_in ** 0.5)
        return jax.random.uniform(k, shape, jnp.float32, -bound, bound)

    w_dr = uinit(ks[0], (Ch, C), C)
    b_dr = uinit(ks[1], (Ch,), C)
    w_c = uinit(ks[2], (Ch, Ch), Ch)
    b_c = uinit(ks[3], (Ch,), Ch)
    w_di = uinit(ks[4], (C, Ch), Ch)
    b_di = uinit(ks[5], (C,), Ch)
    return (w_dr, b_dr, w_c, b_c, w_di, b_di)


def t_forward_ref(x, params):
    """Pure-JAX staged reference of the PyTorch forward (1x1x1 convs == matmuls)."""
    w_dr, b_dr, w_c, b_c, w_di, b_di = params
    N, C, D, H, W = x.shape
    hp = jax.lax.Precision.HIGHEST
    xf = x.reshape(N, C, -1)                                            # [N, C, M]
    r = jnp.einsum("oc,ncm->nom", w_dr, xf, precision=hp) + b_dr[None, :, None]
    x1 = jnp.einsum("oc,ncm->nom", w_c, r, precision=hp) + b_c[None, :, None]
    x3 = jnp.einsum("oc,ncm->nom", w_c, x1, precision=hp) + b_c[None, :, None]
    y = jnp.einsum("oc,ncm->nom", w_di, x1 + r + x3, precision=hp) + b_di[None, :, None]
    return (xf + y).reshape(N, C, D, H, W)


if __name__ == "__main__":
    key = jax.random.PRNGKey(0)
    k_x, k_p, k_x2 = jax.random.split(key, 3)

    # Case 1: small spatial extent (M=512) -> exercises the batch-folding path.
    N, C, D, H, W = 2, 64, 8, 8, 8
    x = jax.random.normal(k_x, (N, C, D, H, W), jnp.float32)
    params = init_params(k_p, C)

    out = jax.block_until_ready(t_forward(x, params))
    ref = t_forward_ref(x, params)
    assert out.shape == x.shape
    assert jnp.allclose(out, ref, atol=1e-3, rtol=1e-3), (
        float(jnp.max(jnp.abs(out - ref)))
    )

    # Case 2: voxel count not a multiple of the lane tile (M=320, tile_m=128)
    # -> exercises the partial-last-block path (no pad / slice anywhere).
    N2, D2, H2, W2 = 1, 4, 8, 10
    x2 = jax.random.normal(k_x2, (N2, C, D2, H2, W2), jnp.float32)
    out2 = jax.block_until_ready(t_forward(x2, params, tile_m=128))
    ref2 = t_forward_ref(x2, params)
    assert out2.shape == x2.shape
    assert jnp.allclose(out2, ref2, atol=1e-3, rtol=1e-3), (
        float(jnp.max(jnp.abs(out2 - ref2)))
    )

    print("KERNEL_OK")
</pallas_src>

<mosaic_0001>
module attributes {stable_mosaic.version = 11 : i64} {
  func.func @_t_kernel(%arg0: i32, %arg1: i32, %arg2: memref<1x64x512xf32, #tpu.memory_space<vmem>>, %arg3: memref<64x64xf32, #tpu.memory_space<vmem>>, %arg4: memref<64x1xf32, #tpu.memory_space<vmem>>, %arg5: memref<1x64x512xf32, #tpu.memory_space<vmem>>) attributes {dimension_semantics = [#tpu.dimension_semantics<parallel>, #tpu.dimension_semantics<parallel>], iteration_bounds = array<i64: 2, 1>, scalar_prefetch = 0 : i64, scratch_operands = 0 : i64, tpu.core_type = #tpu.core_type<tc>, window_params = [{transform_indices = @transform_0, window_bounds = array<i64: 1, 64, 512>}, {pipeline_mode = #tpu.pipeline_mode<synchronous>, transform_indices = @transform_1, window_bounds = array<i64: 64, 64>}, {pipeline_mode = #tpu.pipeline_mode<synchronous>, transform_indices = @transform_2, window_bounds = array<i64: 64, 1>}, {transform_indices = @transform_3, window_bounds = array<i64: 1, 64, 512>}]} {
    %c0 = arith.constant 0 : index
    %c0_0 = arith.constant 0 : index
    %0 = vector.load %arg3[%c0, %c0_0] : memref<64x64xf32, #tpu.memory_space<vmem>>, vector<64x64xf32>
    %c0_1 = arith.constant 0 : index
    %c0_2 = arith.constant 0 : index
    %1 = vector.load %arg4[%c0_1, %c0_2] : memref<64x1xf32, #tpu.memory_space<vmem>>, vector<64x1xf32>
    %c0_3 = arith.constant 0 : index
    %c0_4 = arith.constant 0 : index
    %c0_5 = arith.constant 0 : index
    %2 = vector.load %arg2[%c0_3, %c0_4, %c0_5] : memref<1x64x512xf32, #tpu.memory_space<vmem>>, vector<1x64x512xf32>
    %3 = vector.shape_cast %2 : vector<1x64x512xf32> to vector<64x512xf32>
    %cst = arith.constant dense<0.000000e+00> : vector<64x512xf32>
    %4 = tpu.matmul %0, %3, %cst {dimension_numbers = #tpu.dot_dimension_numbers<[1], [0], [0], [1], [0, 0, 1, 1], [], []>} : vector<64x64xf32>, vector<64x512xf32>, vector<64x512xf32> -> vector<64x512xf32>
    %5 = arith.addf %3, %4 : vector<64x512xf32>
    %6 = vector.broadcast %1 : vector<64x1xf32> to vector<64x512xf32>
    %7 = arith.addf %5, %6 : vector<64x512xf32>
    %c0_6 = arith.constant 0 : index
    %c0_7 = arith.constant 0 : index
    %c0_8 = arith.constant 0 : index
    %8 = vector.load %arg5[%c0_6, %c0_7, %c0_8] : memref<1x64x512xf32, #tpu.memory_space<vmem>>, vector<1x64x512xf32>
    %9 = vector.shape_cast %8 : vector<1x64x512xf32> to vector<64x512xf32>
    %10 = vector.shape_cast %7 : vector<64x512xf32> to vector<1x64x512xf32>
    tpu.vector_store %arg5[%c0_6, %c0_7, %c0_8], %10 {strides = array<i32>} : memref<1x64x512xf32, #tpu.memory_space<vmem>>, vector<1x64x512xf32>,
    return
  }
  func.func @transform_0(%arg0: i32, %arg1: i32) -> (i32, i32, i32) {
    %c0_i32 = arith.constant 0 : i32
    %c0_i32_0 = arith.constant 0 : i32
    return %arg0, %c0_i32, %arg1 : i32, i32, i32
  }
  func.func @transform_1(%arg0: i32, %arg1: i32) -> (i32, i32) {
    %c0_i32 = arith.constant 0 : i32
    %c0_i32_0 = arith.constant 0 : i32
    %c0_i32_1 = arith.constant 0 : i32
    return %c0_i32, %c0_i32_0 : i32, i32
  }
  func.func @transform_2(%arg0: i32, %arg1: i32) -> (i32, i32) {
    %c0_i32 = arith.constant 0 : i32
    %c0_i32_0 = arith.constant 0 : i32
    %c0_i32_1 = arith.constant 0 : i32
    return %c0_i32, %c0_i32_0 : i32, i32
  }
  func.func @transform_3(%arg0: i32, %arg1: i32) -> (i32, i32, i32) {
    %c0_i32 = arith.constant 0 : i32
    %c0_i32_0 = arith.constant 0 : i32
    return %arg0, %c0_i32, %arg1 : i32, i32, i32
  }
}

</mosaic_0001>

<llo_original>
// kernel: tpu_custom_call.1
$region0: #{tpu_custom_call.1}
  #allocation0 [shape = 'u32[]', space=smem, size = 0x4, offset = 0x4, fixed_abs, tag = 'smem constant byte address 0x4 - core index']
  #allocation1 [shape = 'u32[144,128]{1,0:T(1,128)}', space=vmem, size = 0x12000, scoped, tag = 'internal scratch']
  %s0 = inlined_call_operand.hbm [shape: f32[2,64,512], index: 0, kind: input, shape index: {}]
  %s1 = inlined_call_operand.vmem [shape: f32[64,64], index: 1, kind: input, shape index: {}]
  %s2 = inlined_call_operand.vmem [shape: f32[64,1], index: 2, kind: input, shape index: {}]
  %s3 = inlined_call_operand.hbm [shape: f32[2,64,512], index: 3, kind: output, shape index: {}]
  %s4 = sld [smem:[#allocation0]]
  $region49: #{tpu_custom_call.1} parent=0
    _
  %s6 = ssub.s32 1, %s4
  %s7 = scalar_select 0, %s6, %s4
  $region1: #{tpu_custom_call.1} parent=0
    #allocation2 [shape = 'u8[262144]{0}', space=vmem, size = 0x40000, scoped, tag = 'input window, operand 0']
    #allocation3 [shape = 's32[2]{0}', space=sflag, size = 0x8, scoped, tag = 'scoped memory for tpu_custom_call.1']
    #allocation4 [shape = 's32[2]{0}', space=sflag, size = 0x8, scoped, tag = 'scoped memory for tpu_custom_call.1']
    #allocation5 [shape = 'u8[262144]{0}', space=vmem, size = 0x40000, scoped, tag = 'output window, operand 0']
    %8 = vsyncpa [#allocation3], 0
    %s9 = scalar_lea.sflag [#allocation3], 1
    %10 = vsyncpa %s9, 0
    %11 = vsyncpa [#allocation4], 0
    %s12 = scalar_lea.sflag [#allocation4], 1
    %13 = vsyncpa %s12, 0
    loop: start=0, step=1, limit=4
    $region2: #{tpu_custom_call.1} parent=1 // loop_pre_header
      _
    $region3: #{tpu_custom_call.1} parent=1 // loop_header
      %s15 = sphi 0, %s19
      %p16 = scmp.ge.s32.totalorder %s15, 4
      %s22 = sphi 0, %s34
      %s23 = sphi 0, %s30
      %s24 = sphi 0, %s22
      %s25 = sphi 0, %s23
      %s26 = sphi 0, %s24
      %s27 = sphi 0, %s25
      %s39 = sphi 0, %s41
      %s42 = sphi 0, %s39
      %s43 = sphi 0, %s42
      %s59 = sphi 0, %s43
      %s63 = sphi 0, %s63
      %s65 = sphi 0, %s63
      %s66 = sphi 0, %s65
      %s80 = sphi 0, %s66
      %s84 = sphi 0, %s84
      %s86 = sphi 0, %s84
      %s87 = sphi 0, %s86
      %s101 = sphi 0, %s87
      %s109 = sphi 0, %s111
      %s112 = sphi 0, %s109
      %s113 = sphi 0, %s112
      %s129 = sphi 0, %s113
    $region4: #{tpu_custom_call.1} parent=1 // loop_header_branch
      %18 = sbr.rel (%p16) target = $region8
    $region5: #{tpu_custom_call.1} parent=1 // loop_body
      %s20 = ssub.s32 %s15, 1
      %s21 = ssub.s32 %s15, 2
      %s28 = sadd.s32 1, %s23
      %p29 = scmp.ge.s32.totalorder %s28, 1
      %s30 = scalar_select %p29, 0, %s28
      %s31 = sadd.s32 1, %s22
      %s32 = scalar_select %p29, %s31, %s22
      %p33 = scmp.ge.s32.totalorder %s32, 2
      %s34 = scalar_select %p33, 0, %s32
      %s35 = ssub.s32 %s22, %s34
      %s36 = ssub.s32 %s23, %s30
      %s37 = sor.u32 %s35, %s36
      %p38 = scmp.eq.s32.totalorder %s37, 0
      %s40 = sadd.s32 %s39, 1
      %s41 = scalar_select %p38, %s39, %s40
      %p44 = pneg %p38
      %p45 = scmp.eq.s32.totalorder %s15, 1
      %p46 = por %p44, %p45
      %p47 = scmp.ne.s32.totalorder %s39, %s42
      %p48 = scmp.eq.s32.totalorder %s15, 0
      %p49 = por %p47, %p48
      %p50 = scmp.ne.s32.totalorder %s39, %s42
      %p51 = scmp.eq.s32.totalorder %s20, 1
      %p52 = por %p50, %p51
      %p53 = scmp.ne.s32.totalorder %s42, %s43
      %p54 = scmp.eq.s32.totalorder %s20, 0
      %p55 = por %p53, %p54
      %p56 = scmp.ne.s32.totalorder %s42, %s43
      %p57 = scmp.eq.s32.totalorder %s21, 1
      %p58 = por %p56, %p57
      %p60 = scmp.ne.s32.totalorder %s43, %s59
      %p61 = scmp.eq.s32.totalorder %s21, 0
      %p62 = por %p60, %p61
      %s64 = sadd.s32 %s63, 1
      %p67 = scmp.eq.s32.totalorder %s15, 1
      %p68 = scmp.ne.s32.totalorder %s63, %s65
      %p69 = scmp.eq.s32.totalorder %s15, 0
      %p70 = por %p68, %p69
      %p71 = scmp.ne.s32.totalorder %s63, %s65
      %p72 = scmp.eq.s32.totalorder %s20, 1
      %p73 = por %p71, %p72
      %p74 = scmp.ne.s32.totalorder %s65, %s66
      %p75 = scmp.eq.s32.totalorder %s20, 0
      %p76 = por %p74, %p75
      %p77 = scmp.ne.s32.totalorder %s65, %s66
      %p78 = scmp.eq.s32.totalorder %s21, 1
      %p79 = por %p77, %p78
      %p81 = scmp.ne.s32.totalorder %s66, %s80
      %p82 = scmp.eq.s32.totalorder %s21, 0
      %p83 = por %p81, %p82
      %s85 = sadd.s32 %s84, 1
      %p88 = scmp.eq.s32.totalorder %s15, 1
      %p89 = scmp.ne.s32.totalorder %s84, %s86
      %p90 = scmp.eq.s32.totalorder %s15, 0
      %p91 = por %p89, %p90
      %p92 = scmp.ne.s32.totalorder %s84, %s86
      %p93 = scmp.eq.s32.totalorder %s20, 1
      %p94 = por %p92, %p93
      %p95 = scmp.ne.s32.totalorder %s86, %s87
      %p96 = scmp.eq.s32.totalorder %s20, 0
      %p97 = por %p95, %p96
      %p98 = scmp.ne.s32.totalorder %s86, %s87
      %p99 = scmp.eq.s32.totalorder %s21, 1
      %p100 = por %p98, %p99
      %p102 = scmp.ne.s32.totalorder %s87, %s101
      %p103 = scmp.eq.s32.totalorder %s21, 0
      %p104 = por %p102, %p103
      %s105 = ssub.s32 %s22, %s34
      %s106 = ssub.s32 %s23, %s30
      %s107 = sor.u32 %s105, %s106
      %p108 = scmp.eq.s32.totalorder %s107, 0
      %s110 = sadd.s32 %s109, 1
      %s111 = scalar_select %p108, %s109, %s110
      %p114 = pneg %p108
      %p115 = scmp.eq.s32.totalorder %s15, 1
      %p116 = por %p114, %p115
      %p117 = scmp.ne.s32.totalorder %s109, %s112
      %p118 = scmp.eq.s32.totalorder %s15, 0
      %p119 = por %p117, %p118
      %p120 = scmp.ne.s32.totalorder %s109, %s112
      %p121 = scmp.eq.s32.totalorder %s20, 1
      %p122 = por %p120, %p121
      %p123 = scmp.ne.s32.totalorder %s112, %s113
      %p124 = scmp.eq.s32.totalorder %s20, 0
      %p125 = por %p123, %p124
      %p126 = scmp.ne.s32.totalorder %s112, %s113
      %p127 = scmp.eq.s32.totalorder %s21, 1
      %p128 = por %p126, %p127
      %p130 = scmp.ne.s32.totalorder %s113, %s129
      %p131 = scmp.eq.s32.totalorder %s21, 0
      %p132 = por %p130, %p131
      %p133 = scmp.le.s32.totalorder 1, %s15
      %p134 = scmp.lt.s32.totalorder %s15, 3
      %p135 = pnand %p133, %p134
      %p136 = pneg %p135
      // Predicated region
      $region9: #{tpu_custom_call.1} parent=5 // pred_check
        _
      $region10: #{tpu_custom_call.1} parent=5 // pred_check_branch
        %138 = sbr.rel (%p135) target = $region12
      $region11: #{tpu_custom_call.1} parent=5 // pred_region
        %s139 = ssub.s32 %s15, 1
        // Predicated region
        $region13: #{tpu_custom_call.1} parent=11 // pred_check
          %p140 = pneg %p76
        $region14: #{tpu_custom_call.1} parent=11 // pred_check_branch
          %142 = sbr.rel (%p140) target = $region16
        $region15: #{tpu_custom_call.1} parent=11 // pred_region
          _
        $region16: #{tpu_custom_call.1} parent=11 // pred_fallthru
          _
        // Predicated region
        $region17: #{tpu_custom_call.1} parent=11 // pred_check
          %p143 = pneg %p97
        $region18: #{tpu_custom_call.1} parent=11 // pred_check_branch
          %145 = sbr.rel (%p143) target = $region20
        $region19: #{tpu_custom_call.1} parent=11 // pred_region
          _
        $region20: #{tpu_custom_call.1} parent=11 // pred_fallthru
          _
      $region12: #{tpu_custom_call.1} parent=5 // pred_fallthru
        _
      %p146 = scmp.lt.s32.totalorder %s15, 2
      // Predicated region
      $region21: #{tpu_custom_call.1} parent=5 // pred_check
        %p147 = pneg %p146
      $region22: #{tpu_custom_call.1} parent=5 // pred_check_branch
        %149 = sbr.rel (%p147) target = $region24
      $region23: #{tpu_custom_call.1} parent=5 // pred_region
        // Predicated region
        $region25: #{tpu_custom_call.1} parent=23 // pred_check
          %p150 = pneg %p49
        $region26: #{tpu_custom_call.1} parent=23 // pred_check_branch
          %152 = sbr.rel (%p150) target = $region28
        $region27: #{tpu_custom_call.1} parent=23 // pred_region
          %s153 = sand.u32 %s39, 1
          %s154 = scalar_lea.sflag [#allocation3], %s153
          %s155 = sand.u32 %s39, 1
          %s156 = smul.addr %s155, 256
          %s157 = scalar_lea.vmem [#allocation2], %s156
          %s158 = smul.u32 4, %s23
          %s160 = ssub.s32 4096, 4096
          %161 = vsyncadd %s154, %s160
          %s162 = smul.addr %s22, 32
          %s163 = sadd.s32 %s158, %s162
          %s164 = smul.addr %s163, 128
          %s165 = scalar_lea.hbm %s0, %s164
          %s166 = sshll.u32 %s157, 4
          %s167 = int_to_ptr.vmem [resolvable:$true] %s166
          %172 = dma.hbm_to_vmem [thread:$0]  %s165, 4096, %s167, %s154, 512, 512, 32
        $region28: #{tpu_custom_call.1} parent=23 // pred_fallthru
          _
      $region24: #{tpu_custom_call.1} parent=5 // pred_fallthru
        _
      %p173 = scmp.le.s32.totalorder 1, %s15
      %p174 = scmp.lt.s32.totalorder %s15, 3
      %p175 = pnand %p173, %p174
      %p176 = pneg %p175
      // Predicated region
      $region29: #{tpu_custom_call.1} parent=5 // pred_check
        _
      $region30: #{tpu_custom_call.1} parent=5 // pred_check_branch
        %178 = sbr.rel (%p175) target = $region32
      $region31: #{tpu_custom_call.1} parent=5 // pred_region
        %s179 = ssub.s32 %s15, 1
        %s180 = sand.u32 %s42, 1
        %s181 = scalar_lea.sflag [#allocation3], %s180
        %s182 = sand.u32 %s42, 1
        %s183 = smul.addr %s182, 256
        %s184 = scalar_lea.vmem [#allocation2], %s183
        // Predicated region
        $region33: #{tpu_custom_call.1} parent=31 // pred_check
          %p185 = pneg %p55
        $region34: #{tpu_custom_call.1} parent=31 // pred_check_branch
          %187 = sbr.rel (%p185) target = $region36
        $region35: #{tpu_custom_call.1} parent=31 // pred_region
          %188 = dma.done %s181, 4096
        $region36: #{tpu_custom_call.1} parent=31 // pred_fallthru
          _
        %s189 = sand.u32 %s42, 1
        %s190 = scalar_lea.sflag [#allocation3], %s189
        %s191 = sand.u32 %s42, 1
        %s192 = smul.addr %s191, 256
        %s193 = scalar_lea.vmem [#allocation2], %s192
        %p194 = pneg %p55
        %p195 = pneg %p52
        %p196 = pneg %p76
        %p197 = pneg %p73
        %p198 = pneg %p97
        %p199 = pneg %p94
        %p200 = pneg %p125
        %p201 = pneg %p122
        %s202 = sand.u32 %s112, 1
        %s203 = scalar_lea.sflag [#allocation4], %s202
        %s204 = sand.u32 %s112, 1
        %s205 = smul.addr %s204, 256
        %s206 = scalar_lea.vmem [#allocation5], %s205
        %s207 = smul.u32 4, %s25
        %s208 = smul.u32 4, %s25
        %v209 = vld [vmem:[%s1] sm:$0xff]
        %v210 = vld [vmem:[%s1 + $0x8] sm:$0xff]
        %v211 = vld [vmem:[%s1 + $0x10] sm:$0xff]
        %v212 = vld [vmem:[%s1 + $0x18] sm:$0xff]
        %v213 = vld [vmem:[%s1 + $0x20] sm:$0xff]
        %v214 = vld [vmem:[%s1 + $0x28] sm:$0xff]
        %v215 = vld [vmem:[%s1 + $0x30] sm:$0xff]
        %v216 = vld [vmem:[%s1 + $0x38] sm:$0xff]
        %v217 = vld [vmem:[%s2] sm:$0xff]
        %v218 = vld [vmem:[%s2 + $0x8] sm:$0xff]
        %v219 = vld [vmem:[%s2 + $0x10] sm:$0xff]
        %v220 = vld [vmem:[%s2 + $0x18] sm:$0xff]
        %v221 = vld [vmem:[%s2 + $0x20] sm:$0xff]
        %v222 = vld [vmem:[%s2 + $0x28] sm:$0xff]
        %v223 = vld [vmem:[%s2 + $0x30] sm:$0xff]
        %v224 = vld [vmem:[%s2 + $0x38] sm:$0xff]
        %v225 = vld [vmem:[%s184] sm:$0xff]
        %v226 = vld [vmem:[%s184 + $0x8] sm:$0xff]
        %v227 = vld [vmem:[%s184 + $0x10] sm:$0xff]
        %v228 = vld [vmem:[%s184 + $0x18] sm:$0xff]
        %v229 = vld [vmem:[%s184 + $0x20] sm:$0xff]
        %v230 = vld [vmem:[%s184 + $0x28] sm:$0xff]
        %v231 = vld [vmem:[%s184 + $0x30] sm:$0xff]
        %v232 = vld [vmem:[%s184 + $0x38] sm:$0xff]
        %v233 = vld [vmem:[%s184 + $0x40] sm:$0xff]
        %v234 = vld [vmem:[%s184 + $0x48] sm:$0xff]
        %v235 = vld [vmem:[%s184 + $0x50] sm:$0xff]
        %v236 = vld [vmem:[%s184 + $0x58] sm:$0xff]
        %v237 = vld [vmem:[%s184 + $0x60] sm:$0xff]
        %v238 = vld [vmem:[%s184 + $0x68] sm:$0xff]
        %v239 = vld [vmem:[%s184 + $0x70] sm:$0xff]
        %v240 = vld [vmem:[%s184 + $0x78] sm:$0xff]
        %v241 = vld [vmem:[%s184 + $0x80] sm:$0xff]
        %v242 = vld [vmem:[%s184 + $0x88] sm:$0xff]
        %v243 = vld [vmem:[%s184 + $0x90] sm:$0xff]
        %v244 = vld [vmem:[%s184 + $0x98] sm:$0xff]
        %v245 = vld [vmem:[%s184 + $0xa0] sm:$0xff]
        %v246 = vld [vmem:[%s184 + $0xa8] sm:$0xff]
        %v247 = vld [vmem:[%s184 + $0xb0] sm:$0xff]
        %v248 = vld [vmem:[%s184 + $0xb8] sm:$0xff]
        %v249 = vld [vmem:[%s184 + $0xc0] sm:$0xff]
        %v250 = vld [vmem:[%s184 + $0xc8] sm:$0xff]
        %v251 = vld [vmem:[%s184 + $0xd0] sm:$0xff]
        %v252 = vld [vmem:[%s184 + $0xd8] sm:$0xff]
        %v253 = vld [vmem:[%s184 + $0xe0] sm:$0xff]
        %v254 = vld [vmem:[%s184 + $0xe8] sm:$0xff]
        %v255 = vld [vmem:[%s184 + $0xf0] sm:$0xff]
        %v256 = vld [vmem:[%s184 + $0xf8] sm:$0xff]
        %vm257 = vcmask 523264
        %v259 = vsel %vm257, %v209, 0
        %v262 = vsel %vm257, %v210, 0
        %v265 = vsel %vm257, %v211, 0
        %v268 = vsel %vm257, %v212, 0
        %v271 = vsel %vm257, %v213, 0
        %v274 = vsel %vm257, %v214, 0
        %v277 = vsel %vm257, %v215, 0
        %v280 = vsel %vm257, %v216, 0
        %282 = vmatprep.subr.mxu0 0.0
        %283 = vmatpush1.msra.mxu0 0.0
        %284 = vmatprep.subr.mxu0 0.0
        %285 = vmatpush1.msra.mxu0 0.0
        %286 = vmatprep.subr.mxu0 0.0
        %287 = vmatpush1.msra.mxu0 0.0
        %288 = vmatprep.subr.mxu0 0.0
        %289 = vmatpush1.msra.mxu0 0.0
        %290 = vmatprep.subr.mxu0 0.0
        %291 = vmatpush1.msra.mxu0 0.0
        %292 = vmatprep.subr.mxu0 0.0
        %293 = vmatpush1.msra.mxu0 0.0
        %294 = vmatprep.subr.mxu0 0.0
        %295 = vmatpush1.msra.mxu0 0.0
        %296 = vmatprep.subr.mxu0 0.0
        %297 = vmatpush1.msra.mxu0 0.0
        %298 = vmatprep.subr.mxu0 %v254
        %299 = vmatpush1.msra.mxu0 %v253
        %300 = vmatprep.subr.mxu0 %v250
        %301 = vmatpush1.msra.mxu0 %v249
        %302 = vmatprep.subr.mxu0 %v246
        %303 = vmatpush1.msra.mxu0 %v245
        %304 = vmatprep.subr.mxu0 %v242
        %305 = vmatpush1.msra.mxu0 %v241
        %306 = vmatprep.subr.mxu0 %v238
        %307 = vmatpush1.msra.mxu0 %v237
        %308 = vmatprep.subr.mxu0 %v234
        %309 = vmatpush1.msra.mxu0 %v233
        %310 = vmatprep.subr.mxu0 %v230
        %311 = vmatpush1.msra.mxu0 %v229
        %312 = vmatprep.subr.mxu0 %v226
        %313 = vmatpush1.msra.mxu0 %v225
        %314 = vmatprep.subr.mxu0 0.0
        %315 = vmatpush2.msra.mxu0 0.0
        %316 = vmatprep.subr.mxu0 0.0
        %317 = vmatpush2.msra.mxu0 0.0
        %318 = vmatprep.subr.mxu0 0.0
        %319 = vmatpush2.msra.mxu0 0.0
        %320 = vmatprep.subr.mxu0 0.0
        %321 = vmatpush2.msra.mxu0 0.0
        %322 = vmatprep.subr.mxu0 0.0
        %323 = vmatpush2.msra.mxu0 0.0
        %324 = vmatprep.subr.mxu0 0.0
        %325 = vmatpush2.msra.mxu0 0.0
        %326 = vmatprep.subr.mxu0 0.0
        %327 = vmatpush2.msra.mxu0 0.0
        %328 = vmatprep.subr.mxu0 0.0
        %329 = vmatpush2.msra.mxu0 0.0
        %330 = vmatprep.subr.mxu0 0.0
        %331 = vmatpush2.msra.mxu0 0.0
        %332 = vmatprep.subr.mxu0 0.0
        %333 = vmatpush2.msra.mxu0 0.0
        %334 = vmatprep.subr.mxu0 0.0
        %335 = vmatpush2.msra.mxu0 0.0
        %336 = vmatprep.subr.mxu0 0.0
        %337 = vmatpush2.msra.mxu0 0.0
        %338 = vmatprep.subr.mxu0 0.0
        %339 = vmatpush2.msra.mxu0 0.0
        %340 = vmatprep.subr.mxu0 0.0
        %341 = vmatpush2.msra.mxu0 0.0
        %342 = vmatprep.subr.mxu0 0.0
        %343 = vmatpush2.msra.mxu0 0.0
        %344 = vmatprep.subr.mxu0 0.0
        %345 = vmatpush2.msra.mxu0 0.0
        %346 = vmatprep.mubr.f32.mxu0 0.0
        %347 = vmatmul.mubr.f32.gmra.mxu0 %v259
        %v348 = vpop.f32.mrf.mxu0
        %v349 = vadd.f32 0.0, %v348
        %v350 = vpop.f32.mrf.mxu0
        %v351 = vadd.f32 0.0, %v350
        %352 = vmatprep.mubr.f32.mxu0 0.0
        %353 = vmatmul.mubr.f32.gmra.mxu0 %v262
        %v354 = vpop.f32.mrf.mxu0
        %v355 = vadd.f32 0.0, %v354
        %v356 = vpop.f32.mrf.mxu0
        %v357 = vadd.f32 0.0, %v356
        %358 = vmatprep.mubr.f32.mxu0 0.0
        %359 = vmatmul.mubr.f32.gmra.mxu0 %v265
        %v360 = vpop.f32.mrf.mxu0
        %v361 = vadd.f32 0.0, %v360
        %v362 = vpop.f32.mrf.mxu0
        %v363 = vadd.f32 0.0, %v362
        %364 = vmatprep.mubr.f32.mxu0 0.0
        %365 = vmatmul.mubr.f32.gmra.mxu0 %v268
        %v366 = vpop.f32.mrf.mxu0
        %v367 = vadd.f32 0.0, %v366
        %v368 = vpop.f32.mrf.mxu0
        %v369 = vadd.f32 0.0, %v368
        %370 = vmatprep.mubr.f32.mxu0 0.0
        %371 = vmatmul.mubr.f32.gmra.mxu0 %v271
        %v372 = vpop.f32.mrf.mxu0
        %v373 = vadd.f32 0.0, %v372
        %v374 = vpop.f32.mrf.mxu0
        %v375 = vadd.f32 0.0, %v374
        %376 = vmatprep.mubr.f32.mxu0 0.0
        %377 = vmatmul.mubr.f32.gmra.mxu0 %v274
        %v378 = vpop.f32.mrf.mxu0
        %v379 = vadd.f32 0.0, %v378
        %v380 = vpop.f32.mrf.mxu0
        %v381 = vadd.f32 0.0, %v380
        %382 = vmatprep.mubr.f32.mxu0 0.0
        %383 = vmatmul.mubr.f32.gmra.mxu0 %v277
        %v384 = vpop.f32.mrf.mxu0
        %v385 = vadd.f32 0.0, %v384
        %v386 = vpop.f32.mrf.mxu0
        %v387 = vadd.f32 0.0, %v386
        %388 = vmatprep.mubr.f32.mxu0 0.0
        %389 = vmatmul.mubr.f32.gmra.mxu0 %v280
        %v390 = vpop.f32.mrf.mxu0
        %v391 = vadd.f32 0.0, %v390
        %v392 = vpop.f32.mrf.mxu0
        %v393 = vadd.f32 0.0, %v392
        %394 = vdwg.mxu0
        %395 = vmatprep.subr.mxu0 0.0
        %396 = vmatpush1.msra.mxu0 0.0
        %397 = vmatprep.subr.mxu0 0.0
        %398 = vmatpush1.msra.mxu0 0.0
        %399 = vmatprep.subr.mxu0 0.0
        %400 = vmatpush1.msra.mxu0 0.0
        %401 = vmatprep.subr.mxu0 0.0
        %402 = vmatpush1.msra.mxu0 0.0
        %403 = vmatprep.subr.mxu0 0.0
        %404 = vmatpush1.msra.mxu0 0.0
        %405 = vmatprep.subr.mxu0 0.0
        %406 = vmatpush1.msra.mxu0 0.0
        %407 = vmatprep.subr.mxu0 0.0
        %408 = vmatpush1.msra.mxu0 0.0
        %409 = vmatprep.subr.mxu0 0.0
        %410 = vmatpush1.msra.mxu0 0.0
        %411 = vmatprep.subr.mxu0 %v256
        %412 = vmatpush1.msra.mxu0 %v255
        %413 = vmatprep.subr.mxu0 %v252
        %414 = vmatpush1.msra.mxu0 %v251
        %415 = vmatprep.subr.mxu0 %v248
        %416 = vmatpush1.msra.mxu0 %v247
        %417 = vmatprep.subr.mxu0 %v244
        %418 = vmatpush1.msra.mxu0 %v243
        %419 = vmatprep.subr.mxu0 %v240
        %420 = vmatpush1.msra.mxu0 %v239
        %421 = vmatprep.subr.mxu0 %v236
        %422 = vmatpush1.msra.mxu0 %v235
        %423 = vmatprep.subr.mxu0 %v232
        %424 = vmatpush1.msra.mxu0 %v231
        %425 = vmatprep.subr.mxu0 %v228
        %426 = vmatpush1.msra.mxu0 %v227
        %427 = vmatprep.subr.mxu0 0.0
        %428 = vmatpush2.msra.mxu0 0.0
        %429 = vmatprep.subr.mxu0 0.0
        %430 = vmatpush2.msra.mxu0 0.0
        %431 = vmatprep.subr.mxu0 0.0
        %432 = vmatpush2.msra.mxu0 0.0
        %433 = vmatprep.subr.mxu0 0.0
        %434 = vmatpush2.msra.mxu0 0.0
        %435 = vmatprep.subr.mxu0 0.0
        %436 = vmatpush2.msra.mxu0 0.0
        %437 = vmatprep.subr.mxu0 0.0
        %438 = vmatpush2.msra.mxu0 0.0
        %439 = vmatprep.subr.mxu0 0.0
        %440 = vmatpush2.msra.mxu0 0.0
        %441 = vmatprep.subr.mxu0 0.0
        %442 = vmatpush2.msra.mxu0 0.0
        %443 = vmatprep.subr.mxu0 0.0
        %444 = vmatpush2.msra.mxu0 0.0
        %445 = vmatprep.subr.mxu0 0.0
        %446 = vmatpush2.msra.mxu0 0.0
        %447 = vmatprep.subr.mxu0 0.0
        %448 = vmatpush2.msra.mxu0 0.0
        %449 = vmatprep.subr.mxu0 0.0
        %450 = vmatpush2.msra.mxu0 0.0
        %451 = vmatprep.subr.mxu0 0.0
        %452 = vmatpush2.msra.mxu0 0.0
        %453 = vmatprep.subr.mxu0 0.0
        %454 = vmatpush2.msra.mxu0 0.0
        %455 = vmatprep.subr.mxu0 0.0
        %456 = vmatpush2.msra.mxu0 0.0
        %457 = vmatprep.subr.mxu0 0.0
        %458 = vmatpush2.msra.mxu0 0.0
        %459 = vmatprep.mubr.f32.mxu0 0.0
        %460 = vmatmul.mubr.f32.gmra.mxu0 %v259
        %v461 = vpop.f32.mrf.mxu0
        %v462 = vadd.f32 0.0, %v461
        %v463 = vpop.f32.mrf.mxu0
        %v464 = vadd.f32 0.0, %v463
        %465 = vmatprep.mubr.f32.mxu0 0.0
        %466 = vmatmul.mubr.f32.gmra.mxu0 %v262
        %v467 = vpop.f32.mrf.mxu0
        %v468 = vadd.f32 0.0, %v467
        %v469 = vpop.f32.mrf.mxu0
        %v470 = vadd.f32 0.0, %v469
        %471 = vmatprep.mubr.f32.mxu0 0.0
        %472 = vmatmul.mubr.f32.gmra.mxu0 %v265
        %v473 = vpop.f32.mrf.mxu0
        %v474 = vadd.f32 0.0, %v473
        %v475 = vpop.f32.mrf.mxu0
        %v476 = vadd.f32 0.0, %v475
        %477 = vmatprep.mubr.f32.mxu0 0.0
        %478 = vmatmul.mubr.f32.gmra.mxu0 %v268
        %v479 = vpop.f32.mrf.mxu0
        %v480 = vadd.f32 0.0, %v479
        %v481 = vpop.f32.mrf.mxu0
        %v482 = vadd.f32 0.0, %v481
        %483 = vmatprep.mubr.f32.mxu0 0.0
        %484 = vmatmul.mubr.f32.gmra.mxu0 %v271
        %v485 = vpop.f32.mrf.mxu0
        %v486 = vadd.f32 0.0, %v485
        %v487 = vpop.f32.mrf.mxu0
        %v488 = vadd.f32 0.0, %v487
        %489 = vmatprep.mubr.f32.mxu0 0.0
        %490 = vmatmul.mubr.f32.gmra.mxu0 %v274
        %v491 = vpop.f32.mrf.mxu0
        %v492 = vadd.f32 0.0, %v491
        %v493 = vpop.f32.mrf.mxu0
        %v494 = vadd.f32 0.0, %v493
        %495 = vmatprep.mubr.f32.mxu0 0.0
        %496 = vmatmul.mubr.f32.gmra.mxu0 %v277
        %v497 = vpop.f32.mrf.mxu0
        %v498 = vadd.f32 0.0, %v497
        %v499 = vpop.f32.mrf.mxu0
        %v500 = vadd.f32 0.0, %v499
        %501 = vmatprep.mubr.f32.mxu0 0.0
        %502 = vmatmul.mubr.f32.gmra.mxu0 %v280
        %v503 = vpop.f32.mrf.mxu0
        %v504 = vadd.f32 0.0, %v503
        %v505 = vpop.f32.mrf.mxu0
        %v506 = vadd.f32 0.0, %v505
        %507 = vdwg.mxu0
        %v508 = vadd.f32 %v225, %v349
        %v509 = vadd.f32 %v226, %v351
        %v510 = vadd.f32 %v227, %v462
        %v511 = vadd.f32 %v228, %v464
        %v512 = vadd.f32 %v229, %v355
        %v513 = vadd.f32 %v230, %v357
        %v514 = vadd.f32 %v231, %v468
        %v515 = vadd.f32 %v232, %v470
        %v516 = vadd.f32 %v233, %v361
        %v517 = vadd.f32 %v234, %v363
        %v518 = vadd.f32 %v235, %v474
        %v519 = vadd.f32 %v236, %v476
        %v520 = vadd.f32 %v237, %v367
        %v521 = vadd.f32 %v238, %v369
        %v522 = vadd.f32 %v239, %v480
        %v523 = vadd.f32 %v240, %v482
        %v524 = vadd.f32 %v241, %v373
        %v525 = vadd.f32 %v242, %v375
        %v526 = vadd.f32 %v243, %v486
        %v527 = vadd.f32 %v244, %v488
        %v528 = vadd.f32 %v245, %v379
        %v529 = vadd.f32 %v246, %v381
        %v530 = vadd.f32 %v247, %v492
        %v531 = vadd.f32 %v248, %v494
        %v532 = vadd.f32 %v249, %v385
        %v533 = vadd.f32 %v250, %v387
        %v534 = vadd.f32 %v251, %v498
        %v535 = vadd.f32 %v252, %v500
        %v536 = vadd.f32 %v253, %v391
        %v537 = vadd.f32 %v254, %v393
        %v538 = vadd.f32 %v255, %v504
        %v539 = vadd.f32 %v256, %v506
        %541 = vset.pattern.permute.xlu0 0
        %542 = vperm.xlu0 %541, %v217
        %v543 = vpop.permute.xlu0 %542
        %546 = vset.pattern.permute.xlu0 0
        %547 = vperm.xlu0 %546, %v218
        %v548 = vpop.permute.xlu0 %547
        %551 = vset.pattern.permute.xlu0 0
        %552 = vperm.xlu0 %551, %v219
        %v553 = vpop.permute.xlu0 %552
        %556 = vset.pattern.permute.xlu0 0
        %557 = vperm.xlu0 %556, %v220
        %v558 = vpop.permute.xlu0 %557
        %561 = vset.pattern.permute.xlu0 0
        %562 = vperm.xlu0 %561, %v221
        %v563 = vpop.permute.xlu0 %562
        %566 = vset.pattern.permute.xlu0 0
        %567 = vperm.xlu0 %566, %v222
        %v568 = vpop.permute.xlu0 %567
        %571 = vset.pattern.permute.xlu0 0
        %572 = vperm.xlu0 %571, %v223
        %v573 = vpop.permute.xlu0 %572
        %576 = vset.pattern.permute.xlu0 0
        %577 = vperm.xlu0 %576, %v224
        %v578 = vpop.permute.xlu0 %577
        %v580 = vadd.f32 %v508, %v543
        %v581 = vadd.f32 %v509, %v543
        %v582 = vadd.f32 %v510, %v543
        %v583 = vadd.f32 %v511, %v543
        %v584 = vadd.f32 %v512, %v548
        %v585 = vadd.f32 %v513, %v548
        %v586 = vadd.f32 %v514, %v548
        %v587 = vadd.f32 %v515, %v548
        %v588 = vadd.f32 %v516, %v553
        %v589 = vadd.f32 %v517, %v553
        %v590 = vadd.f32 %v518, %v553
        %v591 = vadd.f32 %v519, %v553
        %v592 = vadd.f32 %v520, %v558
        %v593 = vadd.f32 %v521, %v558
        %v594 = vadd.f32 %v522, %v558
        %v595 = vadd.f32 %v523, %v558
        %v596 = vadd.f32 %v524, %v563
        %v597 = vadd.f32 %v525, %v563
        %v598 = vadd.f32 %v526, %v563
        %v599 = vadd.f32 %v527, %v563
        %v600 = vadd.f32 %v528, %v568
        %v601 = vadd.f32 %v529, %v568
        %v602 = vadd.f32 %v530, %v568
        %v603 = vadd.f32 %v531, %v568
        %v604 = vadd.f32 %v532, %v573
        %v605 = vadd.f32 %v533, %v573
        %v606 = vadd.f32 %v534, %v573
        %v607 = vadd.f32 %v535, %v573
        %v608 = vadd.f32 %v536, %v578
        %v609 = vadd.f32 %v537, %v578
        %v610 = vadd.f32 %v538, %v578
        %v611 = vadd.f32 %v539, %v578
        %612 = vst [vmem:[%s206] sm:$0xff] %v580
        %613 = vst [vmem:[%s206 + $0x8] sm:$0xff] %v581
        %614 = vst [vmem:[%s206 + $0x10] sm:$0xff] %v582
        %615 = vst [vmem:[%s206 + $0x18] sm:$0xff] %v583
        %616 = vst [vmem:[%s206 + $0x20] sm:$0xff] %v584
        %617 = vst [vmem:[%s206 + $0x28] sm:$0xff] %v585
        %618 = vst [vmem:[%s206 + $0x30] sm:$0xff] %v586
        %619 = vst [vmem:[%s206 + $0x38] sm:$0xff] %v587
        %620 = vst [vmem:[%s206 + $0x40] sm:$0xff] %v588
        %621 = vst [vmem:[%s206 + $0x48] sm:$0xff] %v589
        %622 = vst [vmem:[%s206 + $0x50] sm:$0xff] %v590
        %623 = vst [vmem:[%s206 + $0x58] sm:$0xff] %v591
        %624 = vst [vmem:[%s206 + $0x60] sm:$0xff] %v592
        %625 = vst [vmem:[%s206 + $0x68] sm:$0xff] %v593
        %626 = vst [vmem:[%s206 + $0x70] sm:$0xff] %v594
        %627 = vst [vmem:[%s206 + $0x78] sm:$0xff] %v595
        %628 = vst [vmem:[%s206 + $0x80] sm:$0xff] %v596
        %629 = vst [vmem:[%s206 + $0x88] sm:$0xff] %v597
        %630 = vst [vmem:[%s206 + $0x90] sm:$0xff] %v598
        %631 = vst [vmem:[%s206 + $0x98] sm:$0xff] %v599
        %632 = vst [vmem:[%s206 + $0xa0] sm:$0xff] %v600
        %633 = vst [vmem:[%s206 + $0xa8] sm:$0xff] %v601
        %634 = vst [vmem:[%s206 + $0xb0] sm:$0xff] %v602
        %635 = vst [vmem:[%s206 + $0xb8] sm:$0xff] %v603
        %636 = vst [vmem:[%s206 + $0xc0] sm:$0xff] %v604
        %637 = vst [vmem:[%s206 + $0xc8] sm:$0xff] %v605
        %638 = vst [vmem:[%s206 + $0xd0] sm:$0xff] %v606
        %639 = vst [vmem:[%s206 + $0xd8] sm:$0xff] %v607
        %640 = vst [vmem:[%s206 + $0xe0] sm:$0xff] %v608
        %641 = vst [vmem:[%s206 + $0xe8] sm:$0xff] %v609
        %642 = vst [vmem:[%s206 + $0xf0] sm:$0xff] %v610
        %643 = vst [vmem:[%s206 + $0xf8] sm:$0xff] %v611
        %s644 = sand.u32 %s112, 1
        %s645 = scalar_lea.sflag [#allocation4], %s644
        %s646 = sand.u32 %s112, 1
        %s647 = smul.addr %s646, 256
        %s648 = scalar_lea.vmem [#allocation5], %s647
        // Predicated region
        $region37: #{tpu_custom_call.1} parent=31 // pred_check
          %p649 = pneg %p122
        $region38: #{tpu_custom_call.1} parent=31 // pred_check_branch
          %651 = sbr.rel (%p649) target = $region40
        $region39: #{tpu_custom_call.1} parent=31 // pred_region
          %s652 = smul.u32 4, %s25
          %s654 = ssub.s32 4096, 4096
          %655 = vsyncadd %s645, %s654
          %s656 = smul.addr %s24, 32
          %s657 = sadd.s32 %s652, %s656
          %s658 = smul.addr %s657, 128
          %s659 = scalar_lea.hbm %s3, %s658
          %s660 = sshll.u32 %s648, 4
          %s661 = int_to_ptr.vmem [resolvable:$true] %s660
          %666 = dma.vmem_to_hbm [thread:$0]  %s661, 4096, %s659, %s645, 512, 512, 32
        $region40: #{tpu_custom_call.1} parent=31 // pred_fallthru
          _
      $region32: #{tpu_custom_call.1} parent=5 // pred_fallthru
        _
      %p667 = scmp.le.s32.totalorder 2, %s15
      // Predicated region
      $region41: #{tpu_custom_call.1} parent=5 // pred_check
        %p668 = pneg %p667
      $region42: #{tpu_custom_call.1} parent=5 // pred_check_branch
        %670 = sbr.rel (%p668) target = $region44
      $region43: #{tpu_custom_call.1} parent=5 // pred_region
        %s671 = ssub.s32 %s15, 2
        // Predicated region
        $region45: #{tpu_custom_call.1} parent=43 // pred_check
          %p672 = pneg %p128
        $region46: #{tpu_custom_call.1} parent=43 // pred_check_branch
          %674 = sbr.rel (%p672) target = $region48
        $region47: #{tpu_custom_call.1} parent=43 // pred_region
          %s675 = sand.u32 %s113, 1
          %s676 = scalar_lea.sflag [#allocation4], %s675
          %s677 = sand.u32 %s113, 1
          %s678 = smul.addr %s677, 256
          %s679 = scalar_lea.vmem [#allocation5], %s678
          %680 = dma.done %s676, 4096
        $region48: #{tpu_custom_call.1} parent=43 // pred_fallthru
          _
      $region44: #{tpu_custom_call.1} parent=5 // pred_fallthru
        _
    $region6: #{tpu_custom_call.1} parent=1 // loop_footer
      %s19 = sadd.s32 1, %s15
    $region7: #{tpu_custom_call.1} parent=1 // loop_footer_branch
      %14 = sbr.rel target = $region3
    $region8: #{tpu_custom_call.1} parent=1 // loop_exit
      _
    %681 = vsyncpa [#allocation3], 1
    %s682 = scalar_lea.sflag [#allocation3], 1
    %683 = vsyncpa %s682, 1
    %684 = vsyncpa [#allocation4], 1
    %s685 = scalar_lea.sflag [#allocation4], 1
    %686 = vsyncpa %s685, 1

</llo_original>
